<compile_context>
chip_gen: v5e
topology: v5e:2x2
jax: 0.10.0
libtpu: 0.0.40
codegen_flags: <defaults>
</compile_context>

<pallas_src>
import functools

import jax
import jax.numpy as jnp
from jax.experimental import pallas as pl
from jax.experimental.pallas import tpu as pltpu


# ----------------------------------------------------------------------------
# Pass 1: streamed global max-pool over HW + fused 1x1-conv MLP -> gate
# ----------------------------------------------------------------------------
def _pool_gate_kernel(x_ref, w1_ref, w2t_ref, gate_ref, pool_scratch,
                      *, hw, hw_tile, mip, mask_tail):
    # x_ref:        (1, C, hw_tile)  one batch, all channels, one spatial tile
    # w1_ref:       (mip, C)         fc1 weight (1x1 conv, no bias)
    # w2t_ref:      (mip, C)         fc2 weight, transposed
    # gate_ref:     (1, 1, C)        sigmoid(fc2(relu(fc1(maxpool(x)))))
    # pool_scratch: (1, C) f32       running max across the spatial grid axis
    hw_i = pl.program_id(1)

    @pl.when(hw_i == 0)
    def _():
        pool_scratch[...] = jnp.full(pool_scratch.shape, -jnp.inf,
                                     dtype=pool_scratch.dtype)

    x = x_ref[...].astype(jnp.float32)                       # (1, C, hw_tile)
    if mask_tail:
        # Mask the padded spatial tail so it cannot win the max.
        pos = hw_i * hw_tile + jax.lax.broadcasted_iota(jnp.int32, x.shape, 2)
        x = jnp.where(pos < hw, x, -jnp.inf)
    pool_scratch[...] = jnp.maximum(pool_scratch[...], jnp.max(x, axis=-1))

    @pl.when(hw_i == pl.num_programs(1) - 1)
    def _():
        pooled = pool_scratch[...]                           # (1, C)
        w1 = w1_ref[...].astype(jnp.float32)                 # (mip, C)
        w2t = w2t_ref[...].astype(jnp.float32)               # (mip, C)
        ca = jnp.zeros_like(pooled)                          # (1, C)
        for m in range(mip):                                 # mip <= 8, unrolled, VPU-only
            h_m = jnp.sum(pooled * w1[m:m + 1, :], axis=-1, keepdims=True)  # (1, 1)
            h_m = jnp.maximum(h_m, 0.0)                      # ReLU
            ca = ca + h_m * w2t[m:m + 1, :]                  # rank-1 update, (1, C)
        gate_ref[...] = jax.nn.sigmoid(ca)[:, None, :].astype(gate_ref.dtype)


# ----------------------------------------------------------------------------
# Pass 2: out = x * gate, streamed over lane-dense (row, HW) tiles
# ----------------------------------------------------------------------------
def _apply_gate_kernel(x_ref, gate_ref, o_ref):
    # x_ref: (rt, hw_tile)   gate_ref: (rt, 1)   o_ref: (rt, hw_tile)
    o_ref[...] = (x_ref[...] * gate_ref[...]).astype(o_ref.dtype)


def _pick_hw_tile(hw, max_tile=2048):
    """Spatial (lane) tile: full extent if small, else a big multiple of 128."""
    if hw <= max_tile:
        return hw                                 # one full-extent block
    if hw % 128 == 0:
        for t in range(max_tile, 1023, -128):     # prefer an exact divisor
            if hw % t == 0:
                return t
    return max_tile                               # multiple of 128; tail masked


def channel_attention(x, w1, w2):
    """x: (B, C, H, W). w1: (mip, C) fc1 weight. w2: (C, mip) fc2 weight."""
    B, C, H, W = x.shape
    mip = w1.shape[0]
    HW = H * W
    x_flat = x.reshape(B, C, HW)
    w2t = w2.T                                    # (mip, C)

    hw_tile = _pick_hw_tile(HW)
    n_hw = pl.cdiv(HW, hw_tile)
    mask_tail = (HW % hw_tile) != 0

    # ---- pass 1: pooled gate, grid = (batch, spatial-reduction) ----
    gate = pl.pallas_call(
        functools.partial(_pool_gate_kernel, hw=HW, hw_tile=hw_tile,
                          mip=mip, mask_tail=mask_tail),
        out_shape=jax.ShapeDtypeStruct((B, 1, C), jnp.float32),
        grid_spec=pltpu.PrefetchScalarGridSpec(
            num_scalar_prefetch=0,
            grid=(B, n_hw),
            in_specs=[
                pl.BlockSpec((1, C, hw_tile), lambda b, h: (b, 0, h)),
                pl.BlockSpec((mip, C), lambda b, h: (0, 0)),
                pl.BlockSpec((mip, C), lambda b, h: (0, 0)),
            ],
            out_specs=pl.BlockSpec((1, 1, C), lambda b, h: (b, 0, 0)),
            scratch_shapes=[pltpu.VMEM((1, C), jnp.float32)],
        ),
        compiler_params=pltpu.CompilerParams(
            dimension_semantics=("parallel", "arbitrary")),
    )(x_flat, w1, w2t)

    # ---- pass 2: flatten to (B*C, HW) for big lane/sublane-dense tiles ----
    BC = B * C
    x2 = x_flat.reshape(BC, HW)
    gate2 = gate.reshape(BC, 1)                   # row b*C + c matches x2 rows

    rt = min(BC, 256) if BC % 8 == 0 else BC      # sublane-dense row tile
    n_r = pl.cdiv(BC, rt)

    out2 = pl.pallas_call(
        _apply_gate_kernel,
        out_shape=jax.ShapeDtypeStruct((BC, HW), x.dtype),
        grid_spec=pltpu.PrefetchScalarGridSpec(
            num_scalar_prefetch=0,
            grid=(n_r, n_hw),
            in_specs=[
                pl.BlockSpec((rt, hw_tile), lambda r, h: (r, h)),
                pl.BlockSpec((rt, 1), lambda r, h: (r, 0)),
            ],
            out_specs=pl.BlockSpec((rt, hw_tile), lambda r, h: (r, h)),
        ),
        compiler_params=pltpu.CompilerParams(
            dimension_semantics=("parallel", "parallel")),
    )(x2, gate2)

    return out2.reshape(B, C, H, W)


def reference(x, w1, w2):
    # Pure-JAX reference mirroring the PyTorch forward.
    pooled = jnp.max(x, axis=(2, 3), keepdims=True)           # (B,C,1,1)
    h = jnp.einsum('mc,bcij->bmij', w1, pooled)               # fc1
    h = jnp.maximum(h, 0.0)                                   # relu1
    ca = jnp.einsum('cm,bmij->bcij', w2, h)                   # fc2
    return x * jax.nn.sigmoid(ca)


if __name__ == "__main__":
    # Shapes chosen so mip = min(8, in_planes // ratio) >= 1 (as in __init__).
    B, C, H, W = 2, 32, 16, 16
    ratio = 16
    mip = min(8, C // ratio)              # = 2

    key = jax.random.PRNGKey(0)
    kx, k1, k2 = jax.random.split(key, 3)
    x = jax.random.normal(kx, (B, C, H, W), dtype=jnp.float32)
    # fc1.weight: (mip, C, 1, 1) stored as (mip, C); fc2.weight: (C, mip, 1, 1) as (C, mip)
    w1 = jax.random.normal(k1, (mip, C), dtype=jnp.float32) * 0.1
    w2 = jax.random.normal(k2, (C, mip), dtype=jnp.float32) * 0.1

    fn = jax.jit(channel_attention)
    out = fn(x, w1, w2)
    out = jax.block_until_ready(out)

    ref = reference(x, w1, w2)
    assert out.shape == (B, C, H, W)
    assert jnp.allclose(out, ref, atol=1e-5, rtol=1e-5)

    print("KERNEL_OK")
</pallas_src>

<mosaic_0001>
module attributes {stable_mosaic.version = 11 : i64} {
  func.func @_pool_gate_kernel(%arg0: i32, %arg1: i32, %arg2: memref<1x32x256xf32, #tpu.memory_space<vmem>>, %arg3: memref<2x32xf32, #tpu.memory_space<vmem>>, %arg4: memref<2x32xf32, #tpu.memory_space<vmem>>, %arg5: memref<1x1x32xf32, #tpu.memory_space<vmem>>, %arg6: memref<1x32xf32, #tpu.memory_space<vmem>>) attributes {dimension_semantics = [#tpu.dimension_semantics<parallel>, #tpu.dimension_semantics<arbitrary>], iteration_bounds = array<i64: 2, 1>, scalar_prefetch = 0 : i64, scratch_operands = 1 : i64, tpu.core_type = #tpu.core_type<tc>, window_params = [{transform_indices = @transform_0, window_bounds = array<i64: 1, 32, 256>}, {pipeline_mode = #tpu.pipeline_mode<synchronous>, transform_indices = @transform_1, window_bounds = array<i64: 2, 32>}, {pipeline_mode = #tpu.pipeline_mode<synchronous>, transform_indices = @transform_2, window_bounds = array<i64: 2, 32>}, {transform_indices = @transform_3, window_bounds = array<i64: 1, 1, 32>}]} {
    %c0_i32 = arith.constant 0 : i32
    %0 = arith.cmpi eq, %arg1, %c0_i32 : i32
    %1 = arith.extui %0 : i1 to i32
    %c0_i32_0 = arith.constant 0 : i32
    %2 = arith.cmpi ne, %1, %c0_i32_0 : i32
    scf.if %2 {
      %cst_9 = arith.constant 0xFF800000 : f32
      %11 = vector.broadcast %cst_9 : f32 to vector<1x32xf32>
      %c0_10 = arith.constant 0 : index
      %c0_11 = arith.constant 0 : index
      %12 = vector.load %arg6[%c0_10, %c0_11] : memref<1x32xf32, #tpu.memory_space<vmem>>, vector<1x32xf32>
      tpu.vector_store %arg6[%c0_10, %c0_11], %11 {strides = array<i32>} : memref<1x32xf32, #tpu.memory_space<vmem>>, vector<1x32xf32>,
    } else {
    }
    %c0 = arith.constant 0 : index
    %c0_1 = arith.constant 0 : index
    %c0_2 = arith.constant 0 : index
    %3 = vector.load %arg2[%c0, %c0_1, %c0_2] : memref<1x32x256xf32, #tpu.memory_space<vmem>>, vector<1x32x256xf32>
    %c0_3 = arith.constant 0 : index
    %c0_4 = arith.constant 0 : index
    %4 = vector.load %arg6[%c0_3, %c0_4] : memref<1x32xf32, #tpu.memory_space<vmem>>, vector<1x32xf32>
    %cst = arith.constant dense<0xFF800000> : vector<1x32xf32>
    %5 = vector.multi_reduction <maximumf>, %3, %cst [2] : vector<1x32x256xf32> to vector<1x32xf32>
    %6 = arith.maximumf %4, %5 : vector<1x32xf32>
    %c0_5 = arith.constant 0 : index
    %c0_6 = arith.constant 0 : index
    %7 = vector.load %arg6[%c0_5, %c0_6] : memref<1x32xf32, #tpu.memory_space<vmem>>, vector<1x32xf32>
    tpu.vector_store %arg6[%c0_5, %c0_6], %6 {strides = array<i32>} : memref<1x32xf32, #tpu.memory_space<vmem>>, vector<1x32xf32>,
    %c0_i32_7 = arith.constant 0 : i32
    %8 = arith.cmpi eq, %arg1, %c0_i32_7 : i32
    %9 = arith.extui %8 : i1 to i32
    %c0_i32_8 = arith.constant 0 : i32
    %10 = arith.cmpi ne, %9, %c0_i32_8 : i32
    scf.if %10 {
      %c0_9 = arith.constant 0 : index
      %c0_10 = arith.constant 0 : index
      %11 = vector.load %arg6[%c0_9, %c0_10] : memref<1x32xf32, #tpu.memory_space<vmem>>, vector<1x32xf32>
      %c0_11 = arith.constant 0 : index
      %c0_12 = arith.constant 0 : index
      %12 = vector.load %arg3[%c0_11, %c0_12] : memref<2x32xf32, #tpu.memory_space<vmem>>, vector<2x32xf32>
      %c0_13 = arith.constant 0 : index
      %c0_14 = arith.constant 0 : index
      %13 = vector.load %arg4[%c0_13, %c0_14] : memref<2x32xf32, #tpu.memory_space<vmem>>, vector<2x32xf32>
      %cst_15 = arith.constant 0.000000e+00 : f32
      %14 = vector.broadcast %cst_15 : f32 to vector<1x32xf32>
      %15 = vector.extract_strided_slice %12 {offsets = [0, 0], sizes = [1, 32], strides = [1, 1]} : vector<2x32xf32> to vector<1x32xf32>
      %16 = arith.mulf %11, %15 : vector<1x32xf32>
      %cst_16 = arith.constant dense<0.000000e+00> : vector<1xf32>
      %17 = vector.multi_reduction <add>, %16, %cst_16 [1] : vector<1x32xf32> to vector<1xf32>
      %18 = vector.shape_cast %17 : vector<1xf32> to vector<1x1xf32>
      %cst_17 = arith.constant 0.000000e+00 : f32
      %19 = vector.broadcast %cst_17 : f32 to vector<1x1xf32>
      %20 = arith.maximumf %18, %19 : vector<1x1xf32>
      %21 = vector.extract_strided_slice %13 {offsets = [0, 0], sizes = [1, 32], strides = [1, 1]} : vector<2x32xf32> to vector<1x32xf32>
      %22 = vector.broadcast %20 : vector<1x1xf32> to vector<1x32xf32>
      %23 = arith.mulf %22, %21 : vector<1x32xf32>
      %24 = arith.addf %14, %23 : vector<1x32xf32>
      %25 = vector.extract_strided_slice %12 {offsets = [1, 0], sizes = [1, 32], strides = [1, 1]} : vector<2x32xf32> to vector<1x32xf32>
      %26 = arith.mulf %11, %25 : vector<1x32xf32>
      %cst_18 = arith.constant dense<0.000000e+00> : vector<1xf32>
      %27 = vector.multi_reduction <add>, %26, %cst_18 [1] : vector<1x32xf32> to vector<1xf32>
      %28 = vector.shape_cast %27 : vector<1xf32> to vector<1x1xf32>
      %cst_19 = arith.constant 0.000000e+00 : f32
      %29 = vector.broadcast %cst_19 : f32 to vector<1x1xf32>
      %30 = arith.maximumf %28, %29 : vector<1x1xf32>
      %31 = vector.extract_strided_slice %13 {offsets = [1, 0], sizes = [1, 32], strides = [1, 1]} : vector<2x32xf32> to vector<1x32xf32>
      %32 = vector.broadcast %30 : vector<1x1xf32> to vector<1x32xf32>
      %33 = arith.mulf %32, %31 : vector<1x32xf32>
      %34 = arith.addf %24, %33 : vector<1x32xf32>
      %35 = arith.negf %34 : vector<1x32xf32>
      %36 = math.exp %35 : vector<1x32xf32>
      %cst_20 = arith.constant 1.000000e+00 : f32
      %37 = vector.broadcast %cst_20 : f32 to vector<1x32xf32>
      %38 = arith.addf %37, %36 : vector<1x32xf32>
      %39 = arith.divf %37, %38 : vector<1x32xf32>
      %40 = vector.shape_cast %39 : vector<1x32xf32> to vector<1x1x32xf32>
      %c0_21 = arith.constant 0 : index
      %c0_22 = arith.constant 0 : index
      %c0_23 = arith.constant 0 : index
      %41 = vector.load %arg5[%c0_21, %c0_22, %c0_23] : memref<1x1x32xf32, #tpu.memory_space<vmem>>, vector<1x1x32xf32>
      tpu.vector_store %arg5[%c0_21, %c0_22, %c0_23], %40 {strides = array<i32>} : memref<1x1x32xf32, #tpu.memory_space<vmem>>, vector<1x1x32xf32>,
    } else {
    }
    return
  }
  func.func @transform_0(%arg0: i32, %arg1: i32) -> (i32, i32, i32) {
    %c0_i32 = arith.constant 0 : i32
    %c0_i32_0 = arith.constant 0 : i32
    return %arg0, %c0_i32, %arg1 : i32, i32, i32
  }
  func.func @transform_1(%arg0: i32, %arg1: i32) -> (i32, i32) {
    %c0_i32 = arith.constant 0 : i32
    %c0_i32_0 = arith.constant 0 : i32
    %c0_i32_1 = arith.constant 0 : i32
    return %c0_i32, %c0_i32_0 : i32, i32
  }
  func.func @transform_2(%arg0: i32, %arg1: i32) -> (i32, i32) {
    %c0_i32 = arith.constant 0 : i32
    %c0_i32_0 = arith.constant 0 : i32
    %c0_i32_1 = arith.constant 0 : i32
    return %c0_i32, %c0_i32_0 : i32, i32
  }
  func.func @transform_3(%arg0: i32, %arg1: i32) -> (i32, i32, i32) {
    %c0_i32 = arith.constant 0 : i32
    %c0_i32_0 = arith.constant 0 : i32
    %c0_i32_1 = arith.constant 0 : i32
    return %arg0, %c0_i32, %c0_i32_0 : i32, i32, i32
  }
}

module attributes {stable_mosaic.version = 11 : i64} {
  func.func @_apply_gate_kernel(%arg0: i32, %arg1: i32, %arg2: memref<64x256xf32, #tpu.memory_space<vmem>>, %arg3: memref<64x1xf32, #tpu.memory_space<vmem>>, %arg4: memref<64x256xf32, #tpu.memory_space<vmem>>) attributes {dimension_semantics = [#tpu.dimension_semantics<parallel>, #tpu.dimension_semantics<parallel>], iteration_bounds = array<i64: 1, 1>, scalar_prefetch = 0 : i64, scratch_operands = 0 : i64, tpu.core_type = #tpu.core_type<tc>, window_params = [{transform_indices = @transform_0, window_bounds = array<i64: 64, 256>}, {transform_indices = @transform_1, window_bounds = array<i64: 64, 1>}, {transform_indices = @transform_2, window_bounds = array<i64: 64, 256>}]} {
    %c0 = arith.constant 0 : index
    %c0_0 = arith.constant 0 : index
    %0 = vector.load %arg2[%c0, %c0_0] : memref<64x256xf32, #tpu.memory_space<vmem>>, vector<64x256xf32>
    %c0_1 = arith.constant 0 : index
    %c0_2 = arith.constant 0 : index
    %1 = vector.load %arg3[%c0_1, %c0_2] : memref<64x1xf32, #tpu.memory_space<vmem>>, vector<64x1xf32>
    %2 = vector.broadcast %1 : vector<64x1xf32> to vector<64x256xf32>
    %3 = arith.mulf %0, %2 : vector<64x256xf32>
    %c0_3 = arith.constant 0 : index
    %c0_4 = arith.constant 0 : index
    %4 = vector.load %arg4[%c0_3, %c0_4] : memref<64x256xf32, #tpu.memory_space<vmem>>, vector<64x256xf32>
    tpu.vector_store %arg4[%c0_3, %c0_4], %3 {strides = array<i32>} : memref<64x256xf32, #tpu.memory_space<vmem>>, vector<64x256xf32>,
    return
  }
  func.func @transform_0(%arg0: i32, %arg1: i32) -> (i32, i32) {
    %c0_i32 = arith.constant 0 : i32
    return %arg0, %arg1 : i32, i32
  }
  func.func @transform_1(%arg0: i32, %arg1: i32) -> (i32, i32) {
    %c0_i32 = arith.constant 0 : i32
    %c0_i32_0 = arith.constant 0 : i32
    return %arg0, %c0_i32 : i32, i32
  }
  func.func @transform_2(%arg0: i32, %arg1: i32) -> (i32, i32) {
    %c0_i32 = arith.constant 0 : i32
    return %arg0, %arg1 : i32, i32
  }
}

</mosaic_0001>

<llo_original>
// kernel: channel_attention.2
$region0: #{channel_attention.2}
  #allocation0 [shape = 'u32[]', space=smem, size = 0x4, offset = 0x4, fixed_abs, tag = 'smem constant byte address 0x4 - core index']
  #allocation1 [shape = 'u32[72,128]{1,0:T(1,128)}', space=vmem, size = 0x9000, scoped, tag = 'internal scratch']
  #allocation2 [shape = 'f32[1,32]{1,0:T(1,128)}', space=vmem, size = 0x200, scoped, tag = 'scratch operand']
  %s0 = inlined_call_operand.vmem [shape: f32[2,32,256], index: 0, kind: input, shape index: {}]
  %s1 = inlined_call_operand.vmem [shape: f32[2,32], index: 1, kind: input, shape index: {}]
  %s2 = inlined_call_operand.vmem [shape: f32[2,32], index: 2, kind: input, shape index: {}]
  %s3 = inlined_call_operand.vmem [shape: f32[2,1,32], index: 3, kind: output, shape index: {}]
  %s4 = sld [smem:[#allocation0]]
  $region53: #{channel_attention.2} parent=0
    _
  %s6 = ssub.s32 1, %s4
  %s7 = scalar_select 0, %s6, %s4
  loop: start=0, step=1, limit=4
  $region2: #{channel_attention.2} parent=0 // loop_pre_header
    _
  $region3: #{channel_attention.2} parent=0 // loop_header
    %s9 = sphi 0, %s13
    %p10 = scmp.ge.s32.totalorder %s9, 4
    %s16 = sphi 0, %s28
    %s17 = sphi 0, %s24
    %s18 = sphi 0, %s16
    %s19 = sphi 0, %s17
    %s20 = sphi 0, %s18
    %s21 = sphi 0, %s19
    %s33 = sphi 0, %s35
    %s36 = sphi 0, %s33
    %s37 = sphi 0, %s36
    %s53 = sphi 0, %s37
    %s57 = sphi 0, %s57
    %s59 = sphi 0, %s57
    %s60 = sphi 0, %s59
    %s74 = sphi 0, %s60
    %s78 = sphi 0, %s78
    %s80 = sphi 0, %s78
    %s81 = sphi 0, %s80
    %s95 = sphi 0, %s81
    %s101 = sphi 0, %s103
    %s104 = sphi 0, %s101
    %s105 = sphi 0, %s104
    %s121 = sphi 0, %s105
  $region4: #{channel_attention.2} parent=0 // loop_header_branch
    %12 = sbr.rel (%p10) target = $region8
  $region5: #{channel_attention.2} parent=0 // loop_body
    %s14 = ssub.s32 %s9, 1
    %s15 = ssub.s32 %s9, 2
    %s22 = sadd.s32 1, %s17
    %p23 = scmp.ge.s32.totalorder %s22, 1
    %s24 = scalar_select %p23, 0, %s22
    %s25 = sadd.s32 1, %s16
    %s26 = scalar_select %p23, %s25, %s16
    %p27 = scmp.ge.s32.totalorder %s26, 2
    %s28 = scalar_select %p27, 0, %s26
    %s29 = ssub.s32 %s16, %s28
    %s30 = ssub.s32 %s17, %s24
    %s31 = sor.u32 %s29, %s30
    %p32 = scmp.eq.s32.totalorder %s31, 0
    %s34 = sadd.s32 %s33, 1
    %s35 = scalar_select %p32, %s33, %s34
    %p38 = pneg %p32
    %p39 = scmp.eq.s32.totalorder %s9, 1
    %p40 = por %p38, %p39
    %p41 = scmp.ne.s32.totalorder %s33, %s36
    %p42 = scmp.eq.s32.totalorder %s9, 0
    %p43 = por %p41, %p42
    %p44 = scmp.ne.s32.totalorder %s33, %s36
    %p45 = scmp.eq.s32.totalorder %s14, 1
    %p46 = por %p44, %p45
    %p47 = scmp.ne.s32.totalorder %s36, %s37
    %p48 = scmp.eq.s32.totalorder %s14, 0
    %p49 = por %p47, %p48
    %p50 = scmp.ne.s32.totalorder %s36, %s37
    %p51 = scmp.eq.s32.totalorder %s15, 1
    %p52 = por %p50, %p51
    %p54 = scmp.ne.s32.totalorder %s37, %s53
    %p55 = scmp.eq.s32.totalorder %s15, 0
    %p56 = por %p54, %p55
    %s58 = sadd.s32 %s57, 1
    %p61 = scmp.eq.s32.totalorder %s9, 1
    %p62 = scmp.ne.s32.totalorder %s57, %s59
    %p63 = scmp.eq.s32.totalorder %s9, 0
    %p64 = por %p62, %p63
    %p65 = scmp.ne.s32.totalorder %s57, %s59
    %p66 = scmp.eq.s32.totalorder %s14, 1
    %p67 = por %p65, %p66
    %p68 = scmp.ne.s32.totalorder %s59, %s60
    %p69 = scmp.eq.s32.totalorder %s14, 0
    %p70 = por %p68, %p69
    %p71 = scmp.ne.s32.totalorder %s59, %s60
    %p72 = scmp.eq.s32.totalorder %s15, 1
    %p73 = por %p71, %p72
    %p75 = scmp.ne.s32.totalorder %s60, %s74
    %p76 = scmp.eq.s32.totalorder %s15, 0
    %p77 = por %p75, %p76
    %s79 = sadd.s32 %s78, 1
    %p82 = scmp.eq.s32.totalorder %s9, 1
    %p83 = scmp.ne.s32.totalorder %s78, %s80
    %p84 = scmp.eq.s32.totalorder %s9, 0
    %p85 = por %p83, %p84
    %p86 = scmp.ne.s32.totalorder %s78, %s80
    %p87 = scmp.eq.s32.totalorder %s14, 1
    %p88 = por %p86, %p87
    %p89 = scmp.ne.s32.totalorder %s80, %s81
    %p90 = scmp.eq.s32.totalorder %s14, 0
    %p91 = por %p89, %p90
    %p92 = scmp.ne.s32.totalorder %s80, %s81
    %p93 = scmp.eq.s32.totalorder %s15, 1
    %p94 = por %p92, %p93
    %p96 = scmp.ne.s32.totalorder %s81, %s95
    %p97 = scmp.eq.s32.totalorder %s15, 0
    %p98 = por %p96, %p97
    %s99 = ssub.s32 %s16, %s28
    %p100 = scmp.eq.s32.totalorder %s99, 0
    %s102 = sadd.s32 %s101, 1
    %s103 = scalar_select %p100, %s101, %s102
    %p106 = pneg %p100
    %p107 = scmp.eq.s32.totalorder %s9, 1
    %p108 = por %p106, %p107
    %p109 = scmp.ne.s32.totalorder %s101, %s104
    %p110 = scmp.eq.s32.totalorder %s9, 0
    %p111 = por %p109, %p110
    %p112 = scmp.ne.s32.totalorder %s101, %s104
    %p113 = scmp.eq.s32.totalorder %s14, 1
    %p114 = por %p112, %p113
    %p115 = scmp.ne.s32.totalorder %s104, %s105
    %p116 = scmp.eq.s32.totalorder %s14, 0
    %p117 = por %p115, %p116
    %p118 = scmp.ne.s32.totalorder %s104, %s105
    %p119 = scmp.eq.s32.totalorder %s15, 1
    %p120 = por %p118, %p119
    %p122 = scmp.ne.s32.totalorder %s105, %s121
    %p123 = scmp.eq.s32.totalorder %s15, 0
    %p124 = por %p122, %p123
    %p125 = scmp.le.s32.totalorder 1, %s9
    %p126 = scmp.lt.s32.totalorder %s9, 3
    %p127 = pnand %p125, %p126
    %p128 = pneg %p127
    // Predicated region
    $region9: #{channel_attention.2} parent=5 // pred_check
      _
    $region10: #{channel_attention.2} parent=5 // pred_check_branch
      %130 = sbr.rel (%p127) target = $region12
    $region11: #{channel_attention.2} parent=5 // pred_region
      %s131 = ssub.s32 %s9, 1
      // Predicated region
      $region13: #{channel_attention.2} parent=11 // pred_check
        %p132 = pneg %p70
      $region14: #{channel_attention.2} parent=11 // pred_check_branch
        %134 = sbr.rel (%p132) target = $region16
      $region15: #{channel_attention.2} parent=11 // pred_region
        _
      $region16: #{channel_attention.2} parent=11 // pred_fallthru
        _
      // Predicated region
      $region17: #{channel_attention.2} parent=11 // pred_check
        %p135 = pneg %p91
      $region18: #{channel_attention.2} parent=11 // pred_check_branch
        %137 = sbr.rel (%p135) target = $region20
      $region19: #{channel_attention.2} parent=11 // pred_region
        _
      $region20: #{channel_attention.2} parent=11 // pred_fallthru
        _
    $region12: #{channel_attention.2} parent=5 // pred_fallthru
      _
    %p138 = scmp.lt.s32.totalorder %s9, 2
    // Predicated region
    $region21: #{channel_attention.2} parent=5 // pred_check
      %p139 = pneg %p138
    $region22: #{channel_attention.2} parent=5 // pred_check_branch
      %141 = sbr.rel (%p139) target = $region24
    $region23: #{channel_attention.2} parent=5 // pred_region
      // Predicated region
      $region25: #{channel_attention.2} parent=23 // pred_check
        %p142 = pneg %p43
      $region26: #{channel_attention.2} parent=23 // pred_check_branch
        %144 = sbr.rel (%p142) target = $region28
      $region27: #{channel_attention.2} parent=23 // pred_region
        %s145 = smul.u32 2, %s17
        %p146 = scmp.lt.s32.totalorder %s16, 1
        %s147 = scalar_select %p146, %s16, 1
        %p148 = scmp.lt.s32.totalorder %s145, 1
        %s149 = scalar_select %p148, %s145, 1
        %s150 = smul.addr %s147, 8
        %s151 = sadd.s32 %s149, %s150
        %s152 = smul.addr %s151, 8
        %s153 = scalar_lea.vmem %s0, %s152
        %s154 = smul.u32 2, %s17
      $region28: #{channel_attention.2} parent=23 // pred_fallthru
        _
    $region24: #{channel_attention.2} parent=5 // pred_fallthru
      _
    %p155 = scmp.le.s32.totalorder 1, %s9
    %p156 = scmp.lt.s32.totalorder %s9, 3
    %p157 = pnand %p155, %p156
    %p158 = pneg %p157
    // Predicated region
    $region29: #{channel_attention.2} parent=5 // pred_check
      _
    $region30: #{channel_attention.2} parent=5 // pred_check_branch
      %160 = sbr.rel (%p157) target = $region32
    $region31: #{channel_attention.2} parent=5 // pred_region
      %s161 = ssub.s32 %s9, 1
      %s162 = smul.u32 2, %s19
      %p163 = scmp.lt.s32.totalorder %s18, 1
      %s164 = scalar_select %p163, %s18, 1
      %p165 = scmp.lt.s32.totalorder %s162, 1
      %s166 = scalar_select %p165, %s162, 1
      %s167 = smul.addr %s164, 8
      %s168 = sadd.s32 %s166, %s167
      %s169 = smul.addr %s168, 8
      %s170 = scalar_lea.vmem %s0, %s169
      %p171 = pneg %p49
      %p172 = pneg %p46
      %p173 = pneg %p70
      %p174 = pneg %p67
      %p175 = pneg %p91
      %p176 = pneg %p88
      %p177 = pneg %p117
      %p178 = pneg %p114
      %p179 = scmp.lt.s32.totalorder %s18, 1
      %s180 = scalar_select %p179, %s18, 1
      %s181 = scalar_lea.vmem %s3, %s180
      %s182 = smul.u32 2, %s19
      %p183 = scmp.lt.s32.totalorder %s18, 1
      %s184 = scalar_select %p183, %s18, 1
      %p185 = scmp.lt.s32.totalorder %s182, 1
      %s186 = scalar_select %p185, %s182, 1
      %s187 = smul.addr %s184, 8
      %s188 = sadd.s32 %s186, %s187
      %s189 = smul.addr %s188, 8
      %s190 = scalar_lea.vmem %s0, %s189
      %s191 = smul.u32 2, %s19
      %p192 = scmp.lt.s32.totalorder %s18, 1
      %s193 = scalar_select %p192, %s18, 1
      %s194 = scalar_lea.vmem %s3, %s193
      %p195 = scmp.eq.s32.totalorder %s19, 0
      // Predicated region
      $region33: #{channel_attention.2} parent=31 // pred_check
        %p196 = pneg %p195
      $region34: #{channel_attention.2} parent=31 // pred_check_branch
        %198 = sbr.rel (%p196) target = $region36
      $region35: #{channel_attention.2} parent=31 // pred_region
        %vm199 = vcmask 253952
        %200 = vst.msk [vmem:[#allocation2] sm:$0x1] %vm199, -inf
      $region36: #{channel_attention.2} parent=31 // pred_fallthru
        _
      %v201 = vld [vmem:[%s190] sm:$0xff]
      %v202 = vld [vmem:[%s190 + $0x8] sm:$0xff]
      %v203 = vld [vmem:[%s190 + $0x10] sm:$0xff]
      %v204 = vld [vmem:[%s190 + $0x18] sm:$0xff]
      %v205 = vld [vmem:[%s190 + $0x20] sm:$0xff]
      %v206 = vld [vmem:[%s190 + $0x28] sm:$0xff]
      %v207 = vld [vmem:[%s190 + $0x30] sm:$0xff]
      %v208 = vld [vmem:[%s190 + $0x38] sm:$0xff]
      %v209 = vld [vmem:[#allocation2] sm:$0x1]
      %v210 = vmax.f32 %v201, %v202
      %211 = vmax.xlane.f32.xlu0 %v210
      %v212 = vpop.xlane.xlu0 %211
      %v213 = vmax.f32 %v203, %v204
      %214 = vmax.xlane.f32.xlu0 %v213
      %v215 = vpop.xlane.xlu0 %214
      %v216 = vmax.f32 %v205, %v206
      %217 = vmax.xlane.f32.xlu0 %v216
      %v218 = vpop.xlane.xlu0 %217
      %v219 = vmax.f32 %v207, %v208
      %220 = vmax.xlane.f32.xlu0 %v219
      %v221 = vpop.xlane.xlu0 %220
      %v226 = vperm.slane %v212, 0
      %v227 = vperm.slane %v212, 1
      %v228 = vperm.slane %v212, 2
      %v229 = vperm.slane %v212, 3
      %v230 = vperm.slane %v212, 4
      %v231 = vperm.slane %v212, 5
      %v232 = vperm.slane %v212, 6
      %v233 = vperm.slane %v212, 7
      %v234 = vperm.slane %v215, 0
      %v235 = vperm.slane %v215, 1
      %v236 = vperm.slane %v215, 2
      %v237 = vperm.slane %v215, 3
      %v238 = vperm.slane %v215, 4
      %v239 = vperm.slane %v215, 5
      %v240 = vperm.slane %v215, 6
      %v241 = vperm.slane %v215, 7
      %v242 = vperm.slane %v218, 0
      %v243 = vperm.slane %v218, 1
      %v244 = vperm.slane %v218, 2
      %v245 = vperm.slane %v218, 3
      %v246 = vperm.slane %v218, 4
      %v247 = vperm.slane %v218, 5
      %v248 = vperm.slane %v218, 6
      %v249 = vperm.slane %v218, 7
      %v250 = vperm.slane %v221, 0
      %v251 = vperm.slane %v221, 1
      %v252 = vperm.slane %v221, 2
      %v253 = vperm.slane %v221, 3
      %v254 = vperm.slane %v221, 4
      %v255 = vperm.slane %v221, 5
      %v256 = vperm.slane %v221, 6
      %v257 = vperm.slane %v221, 7
      %258 = vst [vmem:[#allocation1] ss:$9 sm:$0xff] %v226
      %s259 = scalar_lea.vmem [#allocation1], 1
      %260 = vst [vmem:[%s259] ss:$9 sm:$0xff] %v227
      %s261 = scalar_lea.vmem [#allocation1], 2
      %262 = vst [vmem:[%s261] ss:$9 sm:$0xff] %v228
      %s263 = scalar_lea.vmem [#allocation1], 3
      %264 = vst [vmem:[%s263] ss:$9 sm:$0xff] %v229
      %s265 = scalar_lea.vmem [#allocation1], 4
      %266 = vst [vmem:[%s265] ss:$9 sm:$0xff] %v230
      %s267 = scalar_lea.vmem [#allocation1], 5
      %268 = vst [vmem:[%s267] ss:$9 sm:$0xff] %v231
      %s269 = scalar_lea.vmem [#allocation1], 6
      %270 = vst [vmem:[%s269] ss:$9 sm:$0xff] %v232
      %s271 = scalar_lea.vmem [#allocation1], 7
      %272 = vst [vmem:[%s271] ss:$9 sm:$0xff] %v233
      %v273 = vld [vmem:[#allocation1] sm:$0xff]
      %274 = vst [vmem:[#allocation1] ss:$9 sm:$0xff] %v234
      %275 = vst [vmem:[%s259] ss:$9 sm:$0xff] %v235
      %276 = vst [vmem:[%s261] ss:$9 sm:$0xff] %v236
      %277 = vst [vmem:[%s263] ss:$9 sm:$0xff] %v237
      %278 = vst [vmem:[%s265] ss:$9 sm:$0xff] %v238
      %279 = vst [vmem:[%s267] ss:$9 sm:$0xff] %v239
      %280 = vst [vmem:[%s269] ss:$9 sm:$0xff] %v240
      %281 = vst [vmem:[%s271] ss:$9 sm:$0xff] %v241
      %v282 = vld [vmem:[#allocation1] sm:$0xff]
      %283 = vst [vmem:[#allocation1] ss:$9 sm:$0xff] %v242
      %284 = vst [vmem:[%s259] ss:$9 sm:$0xff] %v243
      %285 = vst [vmem:[%s261] ss:$9 sm:$0xff] %v244
      %286 = vst [vmem:[%s263] ss:$9 sm:$0xff] %v245
      %287 = vst [vmem:[%s265] ss:$9 sm:$0xff] %v246
      %288 = vst [vmem:[%s267] ss:$9 sm:$0xff] %v247
      %289 = vst [vmem:[%s269] ss:$9 sm:$0xff] %v248
      %290 = vst [vmem:[%s271] ss:$9 sm:$0xff] %v249
      %v291 = vld [vmem:[#allocation1] sm:$0xff]
      %292 = vst [vmem:[#allocation1] ss:$9 sm:$0xff] %v250
      %293 = vst [vmem:[%s259] ss:$9 sm:$0xff] %v251
      %294 = vst [vmem:[%s261] ss:$9 sm:$0xff] %v252
      %295 = vst [vmem:[%s263] ss:$9 sm:$0xff] %v253
      %296 = vst [vmem:[%s265] ss:$9 sm:$0xff] %v254
      %297 = vst [vmem:[%s267] ss:$9 sm:$0xff] %v255
      %298 = vst [vmem:[%s269] ss:$9 sm:$0xff] %v256
      %299 = vst [vmem:[%s271] ss:$9 sm:$0xff] %v257
      %v300 = vld [vmem:[#allocation1] sm:$0xff]
      %301 = vset.pattern.permute.xlu0 0
      %302 = vperm.xlu0 %301, %v273
      %v303 = vpop.permute.xlu0 %302
      %304 = vset.pattern.permute.xlu0 0
      %305 = vperm.xlu0 %304, %v282
      %v306 = vpop.permute.xlu0 %305
      %307 = vset.pattern.permute.xlu0 0
      %308 = vperm.xlu0 %307, %v291
      %v309 = vpop.permute.xlu0 %308
      %310 = vset.pattern.permute.xlu0 0
      %311 = vperm.xlu0 %310, %v300
      %v312 = vpop.permute.xlu0 %311
      %v313 = vlaneseq
      %v314 = vand.u32 %v313, 127
      %v315 = vperm.slane %v303, %v314
      %v316 = vadd.s32 %v314, 4294967288
      %v317 = vperm.slane %v306, %v316
      %vm318 = vcmask 130112
      %v319 = vsel %vm318, %v317, %v315
      %v320 = vadd.s32 %v314, 4294967280
      %v321 = vperm.slane %v309, %v320
      %vm322 = vcmask 195712
      %v323 = vsel %vm322, %v321, %v319
      %v324 = vadd.s32 %v314, 4294967272
      %v325 = vperm.slane %v312, %v324
      %vm326 = vcmask 261312
      %v327 = vsel %vm326, %v325, %v323
      %v329 = vmax.f32 %v209, %v327
      %vm330 = vcmask 253952
      %331 = vst.msk [vmem:[#allocation2] sm:$0x1] %vm330, %v329
      // Predicated region
      $region37: #{channel_attention.2} parent=31 // pred_check
        %p332 = pneg %p195
      $region38: #{channel_attention.2} parent=31 // pred_check_branch
        %334 = sbr.rel (%p332) target = $region40
      $region39: #{channel_attention.2} parent=31 // pred_region
        %v335 = vld [vmem:[#allocation2] sm:$0x1]
        %v336 = vld [vmem:[%s1] sm:$0x3]
        %v337 = vld [vmem:[%s2] sm:$0x3]
        %v338 = vmul.f32 %v335, %v336
        %v339 = vsel %vm330, %v338, 0.0
        %340 = vadd.xlane.f32.xlu0 %v339
        %v341 = vpop.xlane.xlu0 %340
        %v342 = vmax.f32 %v341, 0.0
        %v343 = vmul.f32 %v342, %v337
        %v344 = vadd.f32 %v343, 0.0
        %346 = vst [vmem:[#allocation1] sm:$0xff] %v336
        %s347 = scalar_lea.vmem [#allocation1], 1
        %v348 = vld [vmem:[%s347] ss:$9 sm:$0xff]
        %v350 = vmul.f32 %v335, %v348
        %v351 = vsel %vm330, %v350, 0.0
        %352 = vadd.xlane.f32.xlu0 %v351
        %v353 = vpop.xlane.xlu0 %352
        %v354 = vmax.f32 %v353, 0.0
        %v356 = vrot.slane %v337, 1
        %v358 = vmul.f32 %v354, %v356
        %v359 = vadd.f32 %v344, %v358
        %v360 = vxor.u32 %v359, 2147483648
        %v361 = vmul.f32 %v360, 1.442695
        %v362 = vpow.pop %v361
        %v363 = vadd.f32 %v362, 1.0
        %v364 = vrcp.pop %v363
        %v365 = vmul.f32 %v363, %v364
        %v366 = vsub.f32 1.0, %v365
        %v367 = vmul.f32 %v364, %v366
        %v368 = vadd.f32 %v364, %v367
        %vm369 = vweird.f32 %v363
        %vm370 = vweird.f32 %v364
        %vm371 = vmor %vm369, %vm370
        %v372 = vsel %vm371, %v364, %v368
        %v373 = vand.u32 2147483647, %v363
        %vm374 = vcmp.eq.f32.partialorder %v373, 8.507059e+37
        %v375 = vand.u32 %v363, 2147483648
        %v376 = vor.u32 1.1754944e-38, %v375
        %v377 = vsel %vm374, %v376, %v372
        %v378 = vmul.f32 1.0, %v377
        %379 = vst.msk [vmem:[%s194] sm:$0x1] %vm330, %v378
      $region40: #{channel_attention.2} parent=31 // pred_fallthru
        _
      %p380 = scmp.lt.s32.totalorder %s18, 1
      %s381 = scalar_select %p380, %s18, 1
      %s382 = scalar_lea.vmem %s3, %s381
      // Predicated region
      $region41: #{channel_attention.2} parent=31 // pred_check
        %p383 = pneg %p114
      $region42: #{channel_attention.2} parent=31 // pred_check_branch
        %385 = sbr.rel (%p383) target = $region44
      $region43: #{channel_attention.2} parent=31 // pred_region
        _
      $region44: #{channel_attention.2} parent=31 // pred_fallthru
        _
    $region32: #{channel_attention.2} parent=5 // pred_fallthru
      _
    %p386 = scmp.le.s32.totalorder 2, %s9
    // Predicated region
    $region45: #{channel_attention.2} parent=5 // pred_check
      %p387 = pneg %p386
    $region46: #{channel_attention.2} parent=5 // pred_check_branch
      %389 = sbr.rel (%p387) target = $region48
    $region47: #{channel_attention.2} parent=5 // pred_region
      %s390 = ssub.s32 %s9, 2
      // Predicated region
      $region49: #{channel_attention.2} parent=47 // pred_check
        %p391 = pneg %p120
      $region50: #{channel_attention.2} parent=47 // pred_check_branch
        %393 = sbr.rel (%p391) target = $region52
      $region51: #{channel_attention.2} parent=47 // pred_region
        %p394 = scmp.lt.s32.totalorder %s20, 1
        %s395 = scalar_select %p394, %s20, 1
        %s396 = scalar_lea.vmem %s3, %s395
      $region52: #{channel_attention.2} parent=47 // pred_fallthru
        _
    $region48: #{channel_attention.2} parent=5 // pred_fallthru
      _
  $region6: #{channel_attention.2} parent=0 // loop_footer
    %s13 = sadd.s32 1, %s9
  $region7: #{channel_attention.2} parent=0 // loop_footer_branch
    %8 = sbr.rel target = $region3
  $region8: #{channel_attention.2} parent=0 // loop_exit
    _

// kernel: channel_attention.3
$region0: #{channel_attention.3}
  #allocation0 [shape = 'u32[]', space=smem, size = 0x4, offset = 0x4, fixed_abs, tag = 'smem constant byte address 0x4 - core index']
  #allocation1 [shape = 'u32[72,128]{1,0:T(1,128)}', space=vmem, size = 0x9000, scoped, tag = 'internal scratch']
  %s0 = inlined_call_operand.vmem [shape: f32[64,256], index: 0, kind: input, shape index: {}]
  %s1 = inlined_call_operand.vmem [shape: f32[64,1], index: 1, kind: input, shape index: {}]
  %s2 = inlined_call_operand.vmem [shape: f32[64,256], index: 2, kind: output, shape index: {}]
  %s3 = sld [smem:[#allocation0]]
  $region18: #{channel_attention.3} parent=0
    _
  %s5 = ssub.s32 1, %s3
  %s6 = scalar_select 0, %s5, %s3
  // Predicated region
  $region2: #{channel_attention.3} parent=0 // pred_check
    _
  $region3: #{channel_attention.3} parent=0 // pred_check_branch
    %8 = sbr.rel (0) target = $region5
  $region4: #{channel_attention.3} parent=0 // pred_region
    _
  $region5: #{channel_attention.3} parent=0 // pred_fallthru
    _
  // Predicated region
  $region6: #{channel_attention.3} parent=0 // pred_check
    _
  $region7: #{channel_attention.3} parent=0 // pred_check_branch
    %10 = sbr.rel (0) target = $region9
  $region8: #{channel_attention.3} parent=0 // pred_region
    _
  $region9: #{channel_attention.3} parent=0 // pred_fallthru
    _
  %v11 = vld [vmem:[%s0] sm:$0xff]
  %v12 = vld [vmem:[%s0 + $0x8] sm:$0xff]
  %v13 = vld [vmem:[%s0 + $0x10] sm:$0xff]
  %v14 = vld [vmem:[%s0 + $0x18] sm:$0xff]
  %v15 = vld [vmem:[%s0 + $0x20] sm:$0xff]
  %v16 = vld [vmem:[%s0 + $0x28] sm:$0xff]
  %v17 = vld [vmem:[%s0 + $0x30] sm:$0xff]
  %v18 = vld [vmem:[%s0 + $0x38] sm:$0xff]
  %v19 = vld [vmem:[%s0 + $0x40] sm:$0xff]
  %v20 = vld [vmem:[%s0 + $0x48] sm:$0xff]
  %v21 = vld [vmem:[%s0 + $0x50] sm:$0xff]
  %v22 = vld [vmem:[%s0 + $0x58] sm:$0xff]
  %v23 = vld [vmem:[%s0 + $0x60] sm:$0xff]
  %v24 = vld [vmem:[%s0 + $0x68] sm:$0xff]
  %v25 = vld [vmem:[%s0 + $0x70] sm:$0xff]
  %v26 = vld [vmem:[%s0 + $0x78] sm:$0xff]
  %v27 = vld [vmem:[%s1] sm:$0xff]
  %v28 = vld [vmem:[%s1 + $0x8] sm:$0xff]
  %v29 = vld [vmem:[%s1 + $0x10] sm:$0xff]
  %v30 = vld [vmem:[%s1 + $0x18] sm:$0xff]
  %v31 = vld [vmem:[%s1 + $0x20] sm:$0xff]
  %v32 = vld [vmem:[%s1 + $0x28] sm:$0xff]
  %v33 = vld [vmem:[%s1 + $0x30] sm:$0xff]
  %v34 = vld [vmem:[%s1 + $0x38] sm:$0xff]
  %36 = vset.pattern.permute.xlu0 0
  %37 = vperm.xlu0 %36, %v27
  %v38 = vpop.permute.xlu0 %37
  %41 = vset.pattern.permute.xlu0 0
  %42 = vperm.xlu0 %41, %v28
  %v43 = vpop.permute.xlu0 %42
  %46 = vset.pattern.permute.xlu0 0
  %47 = vperm.xlu0 %46, %v29
  %v48 = vpop.permute.xlu0 %47
  %51 = vset.pattern.permute.xlu0 0
  %52 = vperm.xlu0 %51, %v30
  %v53 = vpop.permute.xlu0 %52
  %56 = vset.pattern.permute.xlu0 0
  %57 = vperm.xlu0 %56, %v31
  %v58 = vpop.permute.xlu0 %57
  %61 = vset.pattern.permute.xlu0 0
  %62 = vperm.xlu0 %61, %v32
  %v63 = vpop.permute.xlu0 %62
  %66 = vset.pattern.permute.xlu0 0
  %67 = vperm.xlu0 %66, %v33
  %v68 = vpop.permute.xlu0 %67
  %71 = vset.pattern.permute.xlu0 0
  %72 = vperm.xlu0 %71, %v34
  %v73 = vpop.permute.xlu0 %72
  %v75 = vmul.f32 %v11, %v38
  %v76 = vmul.f32 %v12, %v38
  %v77 = vmul.f32 %v13, %v43
  %v78 = vmul.f32 %v14, %v43
  %v79 = vmul.f32 %v15, %v48
  %v80 = vmul.f32 %v16, %v48
  %v81 = vmul.f32 %v17, %v53
  %v82 = vmul.f32 %v18, %v53
  %v83 = vmul.f32 %v19, %v58
  %v84 = vmul.f32 %v20, %v58
  %v85 = vmul.f32 %v21, %v63
  %v86 = vmul.f32 %v22, %v63
  %v87 = vmul.f32 %v23, %v68
  %v88 = vmul.f32 %v24, %v68
  %v89 = vmul.f32 %v25, %v73
  %v90 = vmul.f32 %v26, %v73
  %91 = vst [vmem:[%s2] sm:$0xff] %v75
  %92 = vst [vmem:[%s2 + $0x8] sm:$0xff] %v76
  %93 = vst [vmem:[%s2 + $0x10] sm:$0xff] %v77
  %94 = vst [vmem:[%s2 + $0x18] sm:$0xff] %v78
  %95 = vst [vmem:[%s2 + $0x20] sm:$0xff] %v79
  %96 = vst [vmem:[%s2 + $0x28] sm:$0xff] %v80
  %97 = vst [vmem:[%s2 + $0x30] sm:$0xff] %v81
  %98 = vst [vmem:[%s2 + $0x38] sm:$0xff] %v82
  %99 = vst [vmem:[%s2 + $0x40] sm:$0xff] %v83
  %100 = vst [vmem:[%s2 + $0x48] sm:$0xff] %v84
  %101 = vst [vmem:[%s2 + $0x50] sm:$0xff] %v85
  %102 = vst [vmem:[%s2 + $0x58] sm:$0xff] %v86
  %103 = vst [vmem:[%s2 + $0x60] sm:$0xff] %v87
  %104 = vst [vmem:[%s2 + $0x68] sm:$0xff] %v88
  %105 = vst [vmem:[%s2 + $0x70] sm:$0xff] %v89
  %106 = vst [vmem:[%s2 + $0x78] sm:$0xff] %v90
  // Predicated region
  $region10: #{channel_attention.3} parent=0 // pred_check
    _
  $region11: #{channel_attention.3} parent=0 // pred_check_branch
    %108 = sbr.rel (0) target = $region13
  $region12: #{channel_attention.3} parent=0 // pred_region
    _
  $region13: #{channel_attention.3} parent=0 // pred_fallthru
    _
  // Predicated region
  $region14: #{channel_attention.3} parent=0 // pred_check
    _
  $region15: #{channel_attention.3} parent=0 // pred_check_branch
    %110 = sbr.rel (0) target = $region17
  $region16: #{channel_attention.3} parent=0 // pred_region
    _
  $region17: #{channel_attention.3} parent=0 // pred_fallthru
    _

</llo_original>
